<compile_context>
chip_gen: v6e
topology: v6e:2x2x1
jax: 0.10.0
libtpu: 0.0.40
codegen_flags: <defaults>
</compile_context>

<pallas_src>
import functools

import jax
import jax.numpy as jnp
from jax.experimental import pallas as pl
from jax.experimental.pallas import tpu as pltpu


def _round_up(n: int, m: int) -> int:
    return ((n + m - 1) // m) * m


def _pad2(a, rows: int, cols: int):
    """Zero-pad a 2-D array up to [rows, cols]."""
    return jnp.pad(a, ((0, rows - a.shape[0]), (0, cols - a.shape[1])))


def mlp_kernel(x_ref, w1_ref, b1_ref, w2_ref, b2_ref, w3_ref, b3_ref, o_ref):
    """Fused 3-layer MLP on one batch tile.

    Three MXU matmuls with f32 accumulation; bias adds / ReLU on the VPU.
    Weights and biases are VMEM-resident across the whole batch grid (their
    index_map returns the same block every step).
    """
    x = x_ref[...]
    b1 = b1_ref[...]          # (1, H1P) -> implicit broadcast in the add
    b2 = b2_ref[...]
    b3 = b3_ref[...]

    h1 = jnp.dot(x, w1_ref[...], preferred_element_type=jnp.float32) + b1
    h1 = jnp.maximum(h1, 0.0)                                     # ReLU (VPU)
    h2 = jnp.dot(h1, w2_ref[...], preferred_element_type=jnp.float32) + b2
    h2 = jnp.maximum(h2, 0.0)                                     # ReLU (VPU)
    out = jnp.dot(h2, w3_ref[...], preferred_element_type=jnp.float32) + b3
    o_ref[...] = out.astype(o_ref.dtype)


def prepare_params(w1, b1, w2, b2, w3, b3):
    """One-time parameter prep (outside the per-call forward):
    zero-pad hidden dims to 128 lanes; K (input) and N (output) stay unpadded.

    wN: [in_features_N, out_features_N]  (pre-transposed vs. nn.Linear.weight)
    bN: [1, out_features_N]
    """
    in_features, hidden1 = w1.shape
    hidden2 = w2.shape[1]
    out_features = w3.shape[1]
    h1p = _round_up(hidden1, 128)
    h2p = _round_up(hidden2, 128)

    w1p = _pad2(w1.astype(jnp.float32), in_features, h1p)
    b1p = _pad2(b1.astype(jnp.float32), 1, h1p)
    w2p = _pad2(w2.astype(jnp.float32), h1p, h2p)
    b2p = _pad2(b2.astype(jnp.float32), 1, h2p)
    w3p = _pad2(w3.astype(jnp.float32), h2p, out_features)
    b3p = b3.astype(jnp.float32)
    return w1p, b1p, w2p, b2p, w3p, b3p


@functools.partial(jax.jit, static_argnames=("block_batch",))
def neural_network_forward(x, w1p, b1p, w2p, b2p, w3p, b3p, *, block_batch=1024):
    """Forward pass equivalent to NeuralNetwork.forward (relu activation).

    x:   [batch, in_features]  f32 (unpadded)
    wNp/bNp: outputs of prepare_params (hidden dims padded to 128).
    """
    batch, in_features = x.shape
    h1p = w1p.shape[1]
    h2p = w2p.shape[1]
    out_features = w3p.shape[1]

    # Real (unpadded) layer widths for the cost estimate.
    hidden1 = h1p
    hidden2 = h2p

    # Batch tile: multiple of 8 sublanes, at most block_batch rows, and (for
    # large batches) small enough to give >= 2 grid steps so v7x megacore can
    # shard the batch axis across both TensorCores.
    TB = min(block_batch, _round_up(batch, 8))
    if batch > 8:
        TB = min(TB, max(8, _round_up(pl.cdiv(batch, 2), 8)))

    grid = (pl.cdiv(batch, TB),)

    x_spec = pl.BlockSpec((TB, in_features), lambda i: (i, 0))
    o_spec = pl.BlockSpec((TB, out_features), lambda i: (i, 0))

    def resident(shape):
        # Same block index every grid step -> stays resident in VMEM.
        return pl.BlockSpec(shape, lambda i: (0, 0))

    x = x.astype(jnp.float32)

    param_bytes = 4 * (w1p.size + b1p.size + w2p.size + b2p.size
                       + w3p.size + b3p.size)
    cost = pl.CostEstimate(
        flops=2 * batch * (in_features * hidden1
                           + hidden1 * hidden2
                           + hidden2 * out_features),
        transcendentals=0,
        bytes_accessed=4 * batch * (in_features + out_features) + param_bytes,
    )

    out = pl.pallas_call(
        mlp_kernel,
        out_shape=jax.ShapeDtypeStruct((batch, out_features), jnp.float32),
        grid_spec=pltpu.PrefetchScalarGridSpec(
            num_scalar_prefetch=0,
            grid=grid,
            in_specs=[
                x_spec,
                resident((in_features, h1p)), resident((1, h1p)),
                resident((h1p, h2p)), resident((1, h2p)),
                resident((h2p, out_features)), resident((1, out_features)),
            ],
            out_specs=o_spec,
        ),
        compiler_params=pltpu.CompilerParams(
            dimension_semantics=("parallel",)),
        cost_estimate=cost,
    )(x, w1p, b1p, w2p, b2p, w3p, b3p)

    return out


def init_linear_params(key, in_features, out_features):
    """Deterministic init mimicking nn.Linear.reset_parameters
    (uniform in +-1/sqrt(fan_in)).  Weight returned as [in, out]."""
    kw, kb = jax.random.split(key)
    bound = 1.0 / jnp.sqrt(jnp.float32(in_features))
    w = jax.random.uniform(kw, (in_features, out_features), jnp.float32,
                           minval=-bound, maxval=bound)
    b = jax.random.uniform(kb, (1, out_features), jnp.float32,
                           minval=-bound, maxval=bound)
    return w, b


if __name__ == "__main__":
    # NeuralNetwork(output_size=10, input_size=99, hidden_size1=64,
    #               hidden_size2=64, activation='relu')
    input_size, hidden1, hidden2, output_size = 99, 64, 64, 10
    batch = 8

    key = jax.random.PRNGKey(0)
    kx, k1, k2, k3 = jax.random.split(key, 4)

    x = jax.random.normal(kx, (batch, input_size), jnp.float32)
    w1, b1 = init_linear_params(k1, input_size, hidden1)
    w2, b2 = init_linear_params(k2, hidden1, hidden2)
    w3, b3 = init_linear_params(k3, hidden2, output_size)

    params = prepare_params(w1, b1, w2, b2, w3, b3)
    params = jax.block_until_ready(params)

    out = neural_network_forward(x, *params)
    out = jax.block_until_ready(out)

    # Pure-JAX reference check of the forward semantics.
    h = jnp.maximum(x @ w1 + b1, 0.0)
    h = jnp.maximum(h @ w2 + b2, 0.0)
    ref = h @ w3 + b3
    assert out.shape == (batch, output_size)
    assert jnp.allclose(out, ref, atol=1e-5, rtol=1e-5)

    print("KERNEL_OK")
</pallas_src>

<mosaic_0001>
module attributes {stable_mosaic.version = 11 : i64} {
  func.func @mlp_kernel(%arg0: i32, %arg1: memref<8x99xf32, #tpu.memory_space<vmem>>, %arg2: memref<99x128xf32, #tpu.memory_space<vmem>>, %arg3: memref<1x128xf32, #tpu.memory_space<vmem>>, %arg4: memref<128x128xf32, #tpu.memory_space<vmem>>, %arg5: memref<1x128xf32, #tpu.memory_space<vmem>>, %arg6: memref<128x10xf32, #tpu.memory_space<vmem>>, %arg7: memref<1x10xf32, #tpu.memory_space<vmem>>, %arg8: memref<8x10xf32, #tpu.memory_space<vmem>>) attributes {dimension_semantics = [#tpu.dimension_semantics<parallel>], iteration_bounds = array<i64: 1>, scalar_prefetch = 0 : i64, scratch_operands = 0 : i64, tpu.core_type = #tpu.core_type<tc>, window_params = [{transform_indices = @transform_0, window_bounds = array<i64: 8, 99>}, {pipeline_mode = #tpu.pipeline_mode<synchronous>, transform_indices = @transform_1, window_bounds = array<i64: 99, 128>}, {pipeline_mode = #tpu.pipeline_mode<synchronous>, transform_indices = @transform_2, window_bounds = array<i64: 1, 128>}, {pipeline_mode = #tpu.pipeline_mode<synchronous>, transform_indices = @transform_3, window_bounds = array<i64: 128, 128>}, {pipeline_mode = #tpu.pipeline_mode<synchronous>, transform_indices = @transform_4, window_bounds = array<i64: 1, 128>}, {pipeline_mode = #tpu.pipeline_mode<synchronous>, transform_indices = @transform_5, window_bounds = array<i64: 128, 10>}, {pipeline_mode = #tpu.pipeline_mode<synchronous>, transform_indices = @transform_6, window_bounds = array<i64: 1, 10>}, {transform_indices = @transform_7, window_bounds = array<i64: 8, 10>}]} {
    %c0 = arith.constant 0 : index
    %c0_0 = arith.constant 0 : index
    %0 = vector.load %arg1[%c0, %c0_0] : memref<8x99xf32, #tpu.memory_space<vmem>>, vector<8x99xf32>
    %c0_1 = arith.constant 0 : index
    %c0_2 = arith.constant 0 : index
    %1 = vector.load %arg3[%c0_1, %c0_2] : memref<1x128xf32, #tpu.memory_space<vmem>>, vector<1x128xf32>
    %c0_3 = arith.constant 0 : index
    %c0_4 = arith.constant 0 : index
    %2 = vector.load %arg5[%c0_3, %c0_4] : memref<1x128xf32, #tpu.memory_space<vmem>>, vector<1x128xf32>
    %c0_5 = arith.constant 0 : index
    %c0_6 = arith.constant 0 : index
    %3 = vector.load %arg7[%c0_5, %c0_6] : memref<1x10xf32, #tpu.memory_space<vmem>>, vector<1x10xf32>
    %c0_7 = arith.constant 0 : index
    %c0_8 = arith.constant 0 : index
    %4 = vector.load %arg2[%c0_7, %c0_8] : memref<99x128xf32, #tpu.memory_space<vmem>>, vector<99x128xf32>
    %cst = arith.constant dense<0.000000e+00> : vector<8x128xf32>
    %5 = tpu.matmul %0, %4, %cst {dimension_numbers = #tpu.dot_dimension_numbers<[1], [0], [0], [1], [0, 0, 1, 1], [], []>} : vector<8x99xf32>, vector<99x128xf32>, vector<8x128xf32> -> vector<8x128xf32>
    %6 = vector.broadcast %1 : vector<1x128xf32> to vector<8x128xf32>
    %7 = arith.addf %5, %6 : vector<8x128xf32>
    %cst_9 = arith.constant 0.000000e+00 : f32
    %8 = vector.broadcast %cst_9 : f32 to vector<8x128xf32>
    %9 = arith.maximumf %7, %8 : vector<8x128xf32>
    %c0_10 = arith.constant 0 : index
    %c0_11 = arith.constant 0 : index
    %10 = vector.load %arg4[%c0_10, %c0_11] : memref<128x128xf32, #tpu.memory_space<vmem>>, vector<128x128xf32>
    %cst_12 = arith.constant dense<0.000000e+00> : vector<8x128xf32>
    %11 = tpu.matmul %9, %10, %cst_12 {dimension_numbers = #tpu.dot_dimension_numbers<[1], [0], [0], [1], [0, 0, 1, 1], [], []>} : vector<8x128xf32>, vector<128x128xf32>, vector<8x128xf32> -> vector<8x128xf32>
    %12 = vector.broadcast %2 : vector<1x128xf32> to vector<8x128xf32>
    %13 = arith.addf %11, %12 : vector<8x128xf32>
    %cst_13 = arith.constant 0.000000e+00 : f32
    %14 = vector.broadcast %cst_13 : f32 to vector<8x128xf32>
    %15 = arith.maximumf %13, %14 : vector<8x128xf32>
    %c0_14 = arith.constant 0 : index
    %c0_15 = arith.constant 0 : index
    %16 = vector.load %arg6[%c0_14, %c0_15] : memref<128x10xf32, #tpu.memory_space<vmem>>, vector<128x10xf32>
    %cst_16 = arith.constant dense<0.000000e+00> : vector<8x10xf32>
    %17 = tpu.matmul %15, %16, %cst_16 {dimension_numbers = #tpu.dot_dimension_numbers<[1], [0], [0], [1], [0, 0, 1, 1], [], []>} : vector<8x128xf32>, vector<128x10xf32>, vector<8x10xf32> -> vector<8x10xf32>
    %18 = vector.broadcast %3 : vector<1x10xf32> to vector<8x10xf32>
    %19 = arith.addf %17, %18 : vector<8x10xf32>
    %c0_17 = arith.constant 0 : index
    %c0_18 = arith.constant 0 : index
    %20 = vector.load %arg8[%c0_17, %c0_18] : memref<8x10xf32, #tpu.memory_space<vmem>>, vector<8x10xf32>
    tpu.vector_store %arg8[%c0_17, %c0_18], %19 {strides = array<i32>} : memref<8x10xf32, #tpu.memory_space<vmem>>, vector<8x10xf32>,
    return
  }
  func.func @transform_0(%arg0: i32) -> (i32, i32) {
    %c0_i32 = arith.constant 0 : i32
    %c0_i32_0 = arith.constant 0 : i32
    return %arg0, %c0_i32 : i32, i32
  }
  func.func @transform_1(%arg0: i32) -> (i32, i32) {
    %c0_i32 = arith.constant 0 : i32
    %c0_i32_0 = arith.constant 0 : i32
    %c0_i32_1 = arith.constant 0 : i32
    return %c0_i32, %c0_i32_0 : i32, i32
  }
  func.func @transform_2(%arg0: i32) -> (i32, i32) {
    %c0_i32 = arith.constant 0 : i32
    %c0_i32_0 = arith.constant 0 : i32
    %c0_i32_1 = arith.constant 0 : i32
    return %c0_i32, %c0_i32_0 : i32, i32
  }
  func.func @transform_3(%arg0: i32) -> (i32, i32) {
    %c0_i32 = arith.constant 0 : i32
    %c0_i32_0 = arith.constant 0 : i32
    %c0_i32_1 = arith.constant 0 : i32
    return %c0_i32, %c0_i32_0 : i32, i32
  }
  func.func @transform_4(%arg0: i32) -> (i32, i32) {
    %c0_i32 = arith.constant 0 : i32
    %c0_i32_0 = arith.constant 0 : i32
    %c0_i32_1 = arith.constant 0 : i32
    return %c0_i32, %c0_i32_0 : i32, i32
  }
  func.func @transform_5(%arg0: i32) -> (i32, i32) {
    %c0_i32 = arith.constant 0 : i32
    %c0_i32_0 = arith.constant 0 : i32
    %c0_i32_1 = arith.constant 0 : i32
    return %c0_i32, %c0_i32_0 : i32, i32
  }
  func.func @transform_6(%arg0: i32) -> (i32, i32) {
    %c0_i32 = arith.constant 0 : i32
    %c0_i32_0 = arith.constant 0 : i32
    %c0_i32_1 = arith.constant 0 : i32
    return %c0_i32, %c0_i32_0 : i32, i32
  }
  func.func @transform_7(%arg0: i32) -> (i32, i32) {
    %c0_i32 = arith.constant 0 : i32
    %c0_i32_0 = arith.constant 0 : i32
    return %arg0, %c0_i32 : i32, i32
  }
}

</mosaic_0001>

<llo_original>
// kernel: neural_network_forward.1
$region0: #{neural_network_forward.1}
  #allocation0 [shape = 'u32[]', space=smem, size = 0x4, offset = 0x4, fixed_abs, tag = 'smem constant byte address 0x4 - core index']
  #allocation1 [shape = 'u32[144,128]{1,0:T(1,128)}', space=vmem, size = 0x12000, scoped, tag = 'internal scratch']
  %s0 = inlined_call_operand.vmem [shape: f32[8,99], index: 0, kind: input, shape index: {}]
  %s1 = inlined_call_operand.hbm [shape: f32[99,128], index: 1, kind: input, shape index: {}]
  %s2 = inlined_call_operand.vmem [shape: f32[1,128], index: 2, kind: input, shape index: {}]
  %s3 = inlined_call_operand.vmem [shape: f32[128,128], index: 3, kind: input, shape index: {}]
  %s4 = inlined_call_operand.vmem [shape: f32[1,128], index: 4, kind: input, shape index: {}]
  %s5 = inlined_call_operand.vmem [shape: f32[128,10], index: 5, kind: input, shape index: {}]
  %s6 = inlined_call_operand.vmem [shape: f32[1,10], index: 6, kind: input, shape index: {}]
  %s7 = inlined_call_operand.hbm [shape: f32[8,10], index: 7, kind: output, shape index: {}]
  %s8 = sld [smem:[#allocation0]]
  $region42: #{neural_network_forward.1} parent=0
    _
  %s10 = ssub.s32 1, %s8
  %s11 = scalar_select 0, %s10, %s8
  $region1: #{neural_network_forward.1} parent=0
    #allocation2 [shape = 'u8[53248]{0}', space=vmem, size = 0xd000, scoped, tag = 'input window, operand 1, single buffered']
    #allocation3 [shape = 's32[1]{0}', space=sflag, size = 0x4, scoped, tag = 'scoped memory for neural_network_forward.1']
    #allocation4 [shape = 's32[1]{0}', space=sflag, size = 0x4, scoped, tag = 'scoped memory for neural_network_forward.1']
    #allocation5 [shape = 'u8[4096]{0}', space=vmem, size = 0x1000, scoped, tag = 'output window, operand 0, single buffered']
    %12 = vsyncpa [#allocation3], 0
    %13 = vsyncpa [#allocation4], 0
    // Predicated region
    $region2: #{neural_network_forward.1} parent=1 // pred_check
      _
    $region3: #{neural_network_forward.1} parent=1 // pred_check_branch
      %15 = sbr.rel (0) target = $region5
    $region4: #{neural_network_forward.1} parent=1 // pred_region
      _
    $region5: #{neural_network_forward.1} parent=1 // pred_fallthru
      _
    // Predicated region
    $region6: #{neural_network_forward.1} parent=1 // pred_check
      _
    $region7: #{neural_network_forward.1} parent=1 // pred_check_branch
      %17 = sbr.rel (0) target = $region9
    $region8: #{neural_network_forward.1} parent=1 // pred_region
      %s19 = ssub.s32 1664, 1664
      %20 = vsyncadd [#allocation3], %s19
      %s21 = sshll.u32 [#allocation2], 4
      %s22 = int_to_ptr.vmem [resolvable:$true] %s21
      %27 = dma.hbm_to_vmem [thread:$0]  %s1, 1664, %s22, [#allocation3], 128, 128, 8
    $region9: #{neural_network_forward.1} parent=1 // pred_fallthru
      _
    // Predicated region
    $region10: #{neural_network_forward.1} parent=1 // pred_check
      _
    $region11: #{neural_network_forward.1} parent=1 // pred_check_branch
      %29 = sbr.rel (0) target = $region13
    $region12: #{neural_network_forward.1} parent=1 // pred_region
      _
    $region13: #{neural_network_forward.1} parent=1 // pred_fallthru
      _
    // Predicated region
    $region14: #{neural_network_forward.1} parent=1 // pred_check
      _
    $region15: #{neural_network_forward.1} parent=1 // pred_check_branch
      %31 = sbr.rel (0) target = $region17
    $region16: #{neural_network_forward.1} parent=1 // pred_region
      _
    $region17: #{neural_network_forward.1} parent=1 // pred_fallthru
      _
    // Predicated region
    $region18: #{neural_network_forward.1} parent=1 // pred_check
      _
    $region19: #{neural_network_forward.1} parent=1 // pred_check_branch
      %33 = sbr.rel (0) target = $region21
    $region20: #{neural_network_forward.1} parent=1 // pred_region
      _
    $region21: #{neural_network_forward.1} parent=1 // pred_fallthru
      _
    // Predicated region
    $region22: #{neural_network_forward.1} parent=1 // pred_check
      _
    $region23: #{neural_network_forward.1} parent=1 // pred_check_branch
      %35 = sbr.rel (0) target = $region25
    $region24: #{neural_network_forward.1} parent=1 // pred_region
      _
    $region25: #{neural_network_forward.1} parent=1 // pred_fallthru
      _
    // Predicated region
    $region26: #{neural_network_forward.1} parent=1 // pred_check
      _
    $region27: #{neural_network_forward.1} parent=1 // pred_check_branch
      %37 = sbr.rel (0) target = $region29
    $region28: #{neural_network_forward.1} parent=1 // pred_region
      _
    $region29: #{neural_network_forward.1} parent=1 // pred_fallthru
      _
    // Predicated region
    $region30: #{neural_network_forward.1} parent=1 // pred_check
      _
    $region31: #{neural_network_forward.1} parent=1 // pred_check_branch
      %39 = sbr.rel (0) target = $region33
    $region32: #{neural_network_forward.1} parent=1 // pred_region
      %40 = dma.done [#allocation3], 1664
    $region33: #{neural_network_forward.1} parent=1 // pred_fallthru
      _
    %v41 = vld [vmem:[%s0] sm:$0xff]
    %v42 = vld [vmem:[%s2] sm:$0x1]
    %v43 = vld [vmem:[%s4] sm:$0x1]
    %v44 = vld [vmem:[%s6] sm:$0x1]
    %v45 = vld [vmem:[#allocation2] sm:$0xff]
    %v46 = vld [vmem:[#allocation2 + $0x8] sm:$0xff]
    %v47 = vld [vmem:[#allocation2 + $0x10] sm:$0xff]
    %v48 = vld [vmem:[#allocation2 + $0x18] sm:$0xff]
    %v49 = vld [vmem:[#allocation2 + $0x20] sm:$0xff]
    %v50 = vld [vmem:[#allocation2 + $0x28] sm:$0xff]
    %v51 = vld [vmem:[#allocation2 + $0x30] sm:$0xff]
    %v52 = vld [vmem:[#allocation2 + $0x38] sm:$0xff]
    %v53 = vld [vmem:[#allocation2 + $0x40] sm:$0xff]
    %v54 = vld [vmem:[#allocation2 + $0x48] sm:$0xff]
    %v55 = vld [vmem:[#allocation2 + $0x50] sm:$0xff]
    %v56 = vld [vmem:[#allocation2 + $0x58] sm:$0xff]
    %v57 = vld [vmem:[#allocation2 + $0x60] sm:$0x7]
    %v59 = vlaneseq
    %v60 = vshrl.u32 %v59, 7
    %v61 = vsub.s32 0, %v60
    %v62 = vrot.slane %v42, %v61
    %vm64 = vcmask 809984
    %v66 = vsel %vm64, %v41, 0
    %vm68 = vcmask 1042432
    %v70 = vsel %vm68, %v57, 0
    %72 = vmatprep.subr.mxu0 0.0
    %73 = vmatpush1.msra.mxu0 0.0
    %74 = vmatprep.subr.mxu0 0.0
    %75 = vmatpush1.msra.mxu0 0.0
    %76 = vmatprep.subr.mxu0 0.0
    %77 = vmatpush1.msra.mxu0 0.0
    %78 = vmatprep.subr.mxu0 0.0
    %79 = vmatpush1.msra.mxu0 %v70
    %80 = vmatprep.subr.mxu0 0.0
    %81 = vmatpush1.msra.mxu0 %v56
    %82 = vmatprep.subr.mxu0 0.0
    %83 = vmatpush1.msra.mxu0 %v55
    %84 = vmatprep.subr.mxu0 0.0
    %85 = vmatpush1.msra.mxu0 %v54
    %86 = vmatprep.subr.mxu0 0.0
    %87 = vmatpush1.msra.mxu0 %v53
    %88 = vmatprep.subr.mxu0 0.0
    %89 = vmatpush1.msra.mxu0 %v52
    %90 = vmatprep.subr.mxu0 0.0
    %91 = vmatpush1.msra.mxu0 %v51
    %92 = vmatprep.subr.mxu0 0.0
    %93 = vmatpush1.msra.mxu0 %v50
    %94 = vmatprep.subr.mxu0 0.0
    %95 = vmatpush1.msra.mxu0 %v49
    %96 = vmatprep.subr.mxu0 0.0
    %97 = vmatpush1.msra.mxu0 %v48
    %98 = vmatprep.subr.mxu0 0.0
    %99 = vmatpush1.msra.mxu0 %v47
    %100 = vmatprep.subr.mxu0 0.0
    %101 = vmatpush1.msra.mxu0 %v46
    %102 = vmatprep.subr.mxu0 0.0
    %103 = vmatpush1.msra.mxu0 %v45
    %104 = vmatprep.subr.mxu0 0.0
    %105 = vmatpush2.msra.mxu0 0.0
    %106 = vmatprep.subr.mxu0 0.0
    %107 = vmatpush2.msra.mxu0 0.0
    %108 = vmatprep.subr.mxu0 0.0
    %109 = vmatpush2.msra.mxu0 0.0
    %110 = vmatprep.subr.mxu0 0.0
    %111 = vmatpush2.msra.mxu0 0.0
    %112 = vmatprep.subr.mxu0 0.0
    %113 = vmatpush2.msra.mxu0 0.0
    %114 = vmatprep.subr.mxu0 0.0
    %115 = vmatpush2.msra.mxu0 0.0
    %116 = vmatprep.subr.mxu0 0.0
    %117 = vmatpush2.msra.mxu0 0.0
    %118 = vmatprep.subr.mxu0 0.0
    %119 = vmatpush2.msra.mxu0 0.0
    %120 = vmatprep.subr.mxu0 0.0
    %121 = vmatpush2.msra.mxu0 0.0
    %122 = vmatprep.subr.mxu0 0.0
    %123 = vmatpush2.msra.mxu0 0.0
    %124 = vmatprep.subr.mxu0 0.0
    %125 = vmatpush2.msra.mxu0 0.0
    %126 = vmatprep.subr.mxu0 0.0
    %127 = vmatpush2.msra.mxu0 0.0
    %128 = vmatprep.subr.mxu0 0.0
    %129 = vmatpush2.msra.mxu0 0.0
    %130 = vmatprep.subr.mxu0 0.0
    %131 = vmatpush2.msra.mxu0 0.0
    %132 = vmatprep.subr.mxu0 0.0
    %133 = vmatpush2.msra.mxu0 0.0
    %134 = vmatprep.subr.mxu0 0.0
    %135 = vmatpush2.msra.mxu0 0.0
    %136 = vmatprep.mubr.f32.mxu0 0.0
    %137 = vmatmul.mubr.f32.gmra.mxu0 %v66
    %v138 = vpop.f32.mrf.mxu0
    %v139 = vadd.f32 %v62, %v138
    %v140 = vpop.f32.mrf.mxu0
    %141 = vdwg.mxu0
    %v142 = vmax.f32 %v139, 0.0
    %v143 = vld [vmem:[%s3] sm:$0xff]
    %v144 = vld [vmem:[%s3 + $0x8] sm:$0xff]
    %v145 = vld [vmem:[%s3 + $0x10] sm:$0xff]
    %v146 = vld [vmem:[%s3 + $0x18] sm:$0xff]
    %v147 = vld [vmem:[%s3 + $0x20] sm:$0xff]
    %v148 = vld [vmem:[%s3 + $0x28] sm:$0xff]
    %v149 = vld [vmem:[%s3 + $0x30] sm:$0xff]
    %v150 = vld [vmem:[%s3 + $0x38] sm:$0xff]
    %v151 = vld [vmem:[%s3 + $0x40] sm:$0xff]
    %v152 = vld [vmem:[%s3 + $0x48] sm:$0xff]
    %v153 = vld [vmem:[%s3 + $0x50] sm:$0xff]
    %v154 = vld [vmem:[%s3 + $0x58] sm:$0xff]
    %v155 = vld [vmem:[%s3 + $0x60] sm:$0xff]
    %v156 = vld [vmem:[%s3 + $0x68] sm:$0xff]
    %v157 = vld [vmem:[%s3 + $0x70] sm:$0xff]
    %v158 = vld [vmem:[%s3 + $0x78] sm:$0xff]
    %v160 = vlaneseq
    %v161 = vshrl.u32 %v160, 7
    %v162 = vsub.s32 0, %v161
    %v163 = vrot.slane %v43, %v162
    %165 = vmatprep.subr.mxu0 0.0
    %166 = vmatpush1.msra.mxu0 %v158
    %167 = vmatprep.subr.mxu0 0.0
    %168 = vmatpush1.msra.mxu0 %v157
    %169 = vmatprep.subr.mxu0 0.0
    %170 = vmatpush1.msra.mxu0 %v156
    %171 = vmatprep.subr.mxu0 0.0
    %172 = vmatpush1.msra.mxu0 %v155
    %173 = vmatprep.subr.mxu0 0.0
    %174 = vmatpush1.msra.mxu0 %v154
    %175 = vmatprep.subr.mxu0 0.0
    %176 = vmatpush1.msra.mxu0 %v153
    %177 = vmatprep.subr.mxu0 0.0
    %178 = vmatpush1.msra.mxu0 %v152
    %179 = vmatprep.subr.mxu0 0.0
    %180 = vmatpush1.msra.mxu0 %v151
    %181 = vmatprep.subr.mxu0 0.0
    %182 = vmatpush1.msra.mxu0 %v150
    %183 = vmatprep.subr.mxu0 0.0
    %184 = vmatpush1.msra.mxu0 %v149
    %185 = vmatprep.subr.mxu0 0.0
    %186 = vmatpush1.msra.mxu0 %v148
    %187 = vmatprep.subr.mxu0 0.0
    %188 = vmatpush1.msra.mxu0 %v147
    %189 = vmatprep.subr.mxu0 0.0
    %190 = vmatpush1.msra.mxu0 %v146
    %191 = vmatprep.subr.mxu0 0.0
    %192 = vmatpush1.msra.mxu0 %v145
    %193 = vmatprep.subr.mxu0 0.0
    %194 = vmatpush1.msra.mxu0 %v144
    %195 = vmatprep.subr.mxu0 0.0
    %196 = vmatpush1.msra.mxu0 %v143
    %197 = vmatprep.subr.mxu0 0.0
    %198 = vmatpush2.msra.mxu0 0.0
    %199 = vmatprep.subr.mxu0 0.0
    %200 = vmatpush2.msra.mxu0 0.0
    %201 = vmatprep.subr.mxu0 0.0
    %202 = vmatpush2.msra.mxu0 0.0
    %203 = vmatprep.subr.mxu0 0.0
    %204 = vmatpush2.msra.mxu0 0.0
    %205 = vmatprep.subr.mxu0 0.0
    %206 = vmatpush2.msra.mxu0 0.0
    %207 = vmatprep.subr.mxu0 0.0
    %208 = vmatpush2.msra.mxu0 0.0
    %209 = vmatprep.subr.mxu0 0.0
    %210 = vmatpush2.msra.mxu0 0.0
    %211 = vmatprep.subr.mxu0 0.0
    %212 = vmatpush2.msra.mxu0 0.0
    %213 = vmatprep.subr.mxu0 0.0
    %214 = vmatpush2.msra.mxu0 0.0
    %215 = vmatprep.subr.mxu0 0.0
    %216 = vmatpush2.msra.mxu0 0.0
    %217 = vmatprep.subr.mxu0 0.0
    %218 = vmatpush2.msra.mxu0 0.0
    %219 = vmatprep.subr.mxu0 0.0
    %220 = vmatpush2.msra.mxu0 0.0
    %221 = vmatprep.subr.mxu0 0.0
    %222 = vmatpush2.msra.mxu0 0.0
    %223 = vmatprep.subr.mxu0 0.0
    %224 = vmatpush2.msra.mxu0 0.0
    %225 = vmatprep.subr.mxu0 0.0
    %226 = vmatpush2.msra.mxu0 0.0
    %227 = vmatprep.subr.mxu0 0.0
    %228 = vmatpush2.msra.mxu0 0.0
    %229 = vmatprep.mubr.f32.mxu0 0.0
    %230 = vmatmul.mubr.f32.gmra.mxu0 %v142
    %v231 = vpop.f32.mrf.mxu0
    %v232 = vadd.f32 %v163, %v231
    %v233 = vpop.f32.mrf.mxu0
    %234 = vdwg.mxu0
    %v235 = vmax.f32 %v232, 0.0
    %v236 = vld [vmem:[%s5] sm:$0xff]
    %v237 = vld [vmem:[%s5 + $0x8] sm:$0xff]
    %v238 = vld [vmem:[%s5 + $0x10] sm:$0xff]
    %v239 = vld [vmem:[%s5 + $0x18] sm:$0xff]
    %v240 = vld [vmem:[%s5 + $0x20] sm:$0xff]
    %v241 = vld [vmem:[%s5 + $0x28] sm:$0xff]
    %v242 = vld [vmem:[%s5 + $0x30] sm:$0xff]
    %v243 = vld [vmem:[%s5 + $0x38] sm:$0xff]
    %v244 = vld [vmem:[%s5 + $0x40] sm:$0xff]
    %v245 = vld [vmem:[%s5 + $0x48] sm:$0xff]
    %v246 = vld [vmem:[%s5 + $0x50] sm:$0xff]
    %v247 = vld [vmem:[%s5 + $0x58] sm:$0xff]
    %v248 = vld [vmem:[%s5 + $0x60] sm:$0xff]
    %v249 = vld [vmem:[%s5 + $0x68] sm:$0xff]
    %v250 = vld [vmem:[%s5 + $0x70] sm:$0xff]
    %v251 = vld [vmem:[%s5 + $0x78] sm:$0xff]
    %v253 = vlaneseq
    %v254 = vshrl.u32 %v253, 7
    %v255 = vsub.s32 0, %v254
    %v256 = vrot.slane %v44, %v255
    %258 = vmatprep.subr.mxu0 0.0
    %259 = vmatpush1.msra.mxu0 %v251
    %260 = vmatprep.subr.mxu0 0.0
    %261 = vmatpush1.msra.mxu0 %v250
    %262 = vmatprep.subr.mxu0 0.0
    %263 = vmatpush1.msra.mxu0 %v249
    %264 = vmatprep.subr.mxu0 0.0
    %265 = vmatpush1.msra.mxu0 %v248
    %266 = vmatprep.subr.mxu0 0.0
    %267 = vmatpush1.msra.mxu0 %v247
    %268 = vmatprep.subr.mxu0 0.0
    %269 = vmatpush1.msra.mxu0 %v246
    %270 = vmatprep.subr.mxu0 0.0
    %271 = vmatpush1.msra.mxu0 %v245
    %272 = vmatprep.subr.mxu0 0.0
    %273 = vmatpush1.msra.mxu0 %v244
    %274 = vmatprep.subr.mxu0 0.0
    %275 = vmatpush1.msra.mxu0 %v243
    %276 = vmatprep.subr.mxu0 0.0
    %277 = vmatpush1.msra.mxu0 %v242
    %278 = vmatprep.subr.mxu0 0.0
    %279 = vmatpush1.msra.mxu0 %v241
    %280 = vmatprep.subr.mxu0 0.0
    %281 = vmatpush1.msra.mxu0 %v240
    %282 = vmatprep.subr.mxu0 0.0
    %283 = vmatpush1.msra.mxu0 %v239
    %284 = vmatprep.subr.mxu0 0.0
    %285 = vmatpush1.msra.mxu0 %v238
    %286 = vmatprep.subr.mxu0 0.0
    %287 = vmatpush1.msra.mxu0 %v237
    %288 = vmatprep.subr.mxu0 0.0
    %289 = vmatpush1.msra.mxu0 %v236
    %290 = vmatprep.subr.mxu0 0.0
    %291 = vmatpush2.msra.mxu0 0.0
    %292 = vmatprep.subr.mxu0 0.0
    %293 = vmatpush2.msra.mxu0 0.0
    %294 = vmatprep.subr.mxu0 0.0
    %295 = vmatpush2.msra.mxu0 0.0
    %296 = vmatprep.subr.mxu0 0.0
    %297 = vmatpush2.msra.mxu0 0.0
    %298 = vmatprep.subr.mxu0 0.0
    %299 = vmatpush2.msra.mxu0 0.0
    %300 = vmatprep.subr.mxu0 0.0
    %301 = vmatpush2.msra.mxu0 0.0
    %302 = vmatprep.subr.mxu0 0.0
    %303 = vmatpush2.msra.mxu0 0.0
    %304 = vmatprep.subr.mxu0 0.0
    %305 = vmatpush2.msra.mxu0 0.0
    %306 = vmatprep.subr.mxu0 0.0
    %307 = vmatpush2.msra.mxu0 0.0
    %308 = vmatprep.subr.mxu0 0.0
    %309 = vmatpush2.msra.mxu0 0.0
    %310 = vmatprep.subr.mxu0 0.0
    %311 = vmatpush2.msra.mxu0 0.0
    %312 = vmatprep.subr.mxu0 0.0
    %313 = vmatpush2.msra.mxu0 0.0
    %314 = vmatprep.subr.mxu0 0.0
    %315 = vmatpush2.msra.mxu0 0.0
    %316 = vmatprep.subr.mxu0 0.0
    %317 = vmatpush2.msra.mxu0 0.0
    %318 = vmatprep.subr.mxu0 0.0
    %319 = vmatpush2.msra.mxu0 0.0
    %320 = vmatprep.subr.mxu0 0.0
    %321 = vmatpush2.msra.mxu0 0.0
    %322 = vmatprep.mubr.f32.mxu0 0.0
    %323 = vmatmul.mubr.f32.gmra.mxu0 %v235
    %v324 = vpop.f32.mrf.mxu0
    %v325 = vadd.f32 %v256, %v324
    %v326 = vpop.f32.mrf.mxu0
    %327 = vdwg.mxu0
    %vm328 = vcmask 80896
    %329 = vst.msk [vmem:[#allocation5] sm:$0xff] %vm328, %v325
    // Predicated region
    $region34: #{neural_network_forward.1} parent=1 // pred_check
      _
    $region35: #{neural_network_forward.1} parent=1 // pred_check_branch
      %331 = sbr.rel (0) target = $region37
    $region36: #{neural_network_forward.1} parent=1 // pred_region
      %s333 = ssub.s32 128, 128
      %334 = vsyncadd [#allocation4], %s333
      %s336 = sshll.u32 [#allocation5], 4
      %s337 = int_to_ptr.vmem [resolvable:$true] %s336
      %339 = dma.vmem_to_hbm [thread:$0]  %s337, 128, %s7, [#allocation4]
    $region37: #{neural_network_forward.1} parent=1 // pred_fallthru
      _
    // Predicated region
    $region38: #{neural_network_forward.1} parent=1 // pred_check
      _
    $region39: #{neural_network_forward.1} parent=1 // pred_check_branch
      %341 = sbr.rel (0) target = $region41
    $region40: #{neural_network_forward.1} parent=1 // pred_region
      %342 = dma.done [#allocation4], 128
    $region41: #{neural_network_forward.1} parent=1 // pred_fallthru
      _
    %343 = vsyncpa [#allocation3], 1
    %344 = vsyncpa [#allocation4], 1

</llo_original>
